<compile_context>
chip_gen: v5e
topology: v5e:2x2
jax: 0.10.0
libtpu: 0.0.40
codegen_flags: <defaults>
</compile_context>

<pallas_src>
import functools

import jax
import jax.numpy as jnp
import numpy as np
from jax.experimental import pallas as pl
from jax.experimental.pallas import tpu as pltpu


def _rcu_kernel(x_ref, w1_ref, w2_ref, o_ref, taps_ref, *, H, W):
    """One batch element per grid step.

    x_ref   : (1, Cp, HWp)     input slab (channels on sublanes, pixels on lanes)
    w*_ref  : (Cp, 9*Cp + 8)   stacked conv weights; bias folded into column 9*Cp
    o_ref   : (1, Cp, HWp)     output slab
    taps_ref: (9*Cp + 8, HWp)  VMEM scratch: 9 shifted/masked taps + ones rows
    """
    Cp = x_ref.shape[1]
    HWp = x_ref.shape[2]

    # Boundary masks: four (1, HWp) f32 row vectors, built ONCE and shared by
    # both convs; broadcast along sublanes inside the multiplies below.
    lane = jax.lax.broadcasted_iota(jnp.int32, (1, HWp), 1)
    xx = lane % W
    left_m = (xx >= 1).astype(jnp.float32)              # valid lanes for dx = -1
    right_m = (xx <= W - 2).astype(jnp.float32)         # valid lanes for dx = +1
    top_m = (lane >= W).astype(jnp.float32)             # valid lanes for dy = -1
    bot_m = (lane < (H - 1) * W).astype(jnp.float32)    # valid lanes for dy = +1

    # Ones rows used to fold the bias into the matmul (weight columns past the
    # first of this block are zero, so filling all rows with 1.0 is harmless).
    taps_ref[9 * Cp:, :] = jnp.ones((taps_ref.shape[0] - 9 * Cp, HWp), jnp.float32)

    def conv3x3(h, w_ref):
        # h: (Cp, HWp) f32.  Horizontal (dx) shifts + x-masks computed once and
        # reused by all three dy rows.
        g = (pltpu.roll(h, shift=1, axis=1) * left_m,          # dx = -1
             h,                                                # dx =  0
             pltpu.roll(h, shift=HWp - 1, axis=1) * right_m)   # dx = +1
        for ky in range(3):
            dy = ky - 1
            for kx in range(3):
                t = ky * 3 + kx
                v = g[kx]
                if dy != 0:
                    # Shift by one image row; wrapped / out-of-image rows are
                    # zeroed by the broadcast y-mask (so circular wrap over the
                    # padded HWp axis never contaminates real output lanes).
                    v = pltpu.roll(v, shift=(-dy * W) % HWp, axis=1)
                    v = v * (top_m if dy < 0 else bot_m)
                taps_ref[t * Cp:(t + 1) * Cp, :] = v
        # Single MXU matmul per conv; bias comes via the ones rows.
        return jnp.dot(w_ref[...], taps_ref[...], preferred_element_type=jnp.float32)

    h = jnp.maximum(x_ref[0].astype(jnp.float32), 0.0)    # activation (ReLU)
    h = conv3x3(h, w1_ref)                                 # conv1 (+ bias)
    h = jnp.maximum(h, 0.0)                                # activation (ReLU)
    h = conv3x3(h, w2_ref)                                 # conv2 (+ bias)
    # Residual add: re-read x so it is not held live across both convs.
    o_ref[0] = (h + x_ref[0].astype(jnp.float32)).astype(o_ref.dtype)


def _stack_weights(w, b, Cp):
    """PyTorch (Cout, Cin, 3, 3) weights + (Cout,) bias -> (Cp, 9*Cp + 8).

    Column t*Cp + ci (t = ky*3 + kx) holds w[co, ci, ky, kx]; column 9*Cp holds
    the bias (matched by the ones rows of the tap scratch); remaining columns
    are zero padding.
    """
    C = w.shape[0]
    wt = jnp.transpose(w, (0, 2, 3, 1)).reshape(C, 9, C)       # (Cout, tap, Cin)
    wt = jnp.pad(wt, ((0, Cp - C), (0, 0), (0, Cp - C)))       # pad channels to Cp
    wt = wt.reshape(Cp, 9 * Cp)
    bias = jnp.pad(b, (0, Cp - C)).reshape(Cp, 1)
    pad = jnp.zeros((Cp, 7), wt.dtype)
    return jnp.concatenate([wt, bias, pad], axis=1).astype(jnp.float32)


def residual_conv_unit(x_nchw, w1, b1, w2, b2):
    """x_nchw: (N, C, H, W); w*: (Cout, Cin, 3, 3) PyTorch layout; b*: (C,)."""
    N, C, H, W = x_nchw.shape
    HW = H * W
    Cp = ((C + 7) // 8) * 8           # sublane multiple
    HWp = ((HW + 127) // 128) * 128   # lane-dense multiple of 128
    K = 9 * Cp + 8                    # stacked contraction depth (taps + bias rows)

    x = x_nchw.reshape(N, C, HW)
    if Cp != C or HWp != HW:
        x = jnp.pad(x, ((0, 0), (0, Cp - C), (0, HWp - HW)))

    w1s = _stack_weights(w1, b1, Cp)
    w2s = _stack_weights(w2, b2, Cp)

    kernel = functools.partial(_rcu_kernel, H=H, W=W)

    out = pl.pallas_call(
        kernel,
        out_shape=jax.ShapeDtypeStruct((N, Cp, HWp), x.dtype),
        grid_spec=pltpu.PrefetchScalarGridSpec(
            num_scalar_prefetch=0,
            grid=(N,),
            in_specs=[
                pl.BlockSpec((1, Cp, HWp), lambda n: (n, 0, 0)),
                # Weight blocks are constant across the grid (full-array blocks).
                # TODO(synk): at large C, single-buffer these (pl.Buffered(1)).
                pl.BlockSpec((Cp, K), lambda n: (0, 0)),
                pl.BlockSpec((Cp, K), lambda n: (0, 0)),
            ],
            out_specs=pl.BlockSpec((1, Cp, HWp), lambda n: (n, 0, 0)),
            scratch_shapes=[pltpu.VMEM((K, HWp), jnp.float32)],
        ),
        compiler_params=pltpu.CompilerParams(
            dimension_semantics=("parallel",),   # batch axis shards across TCs
            vmem_limit_bytes=32 * 1024 * 1024,   # modest, safe on v5e/v6e/v7x
        ),
    )(x, w1s, w2s)

    return out[:, :C, :HW].reshape(N, C, H, W)


def _reference(x, w1, b1, w2, b2):
    """Pure-JAX reference (NCHW, matches PyTorch semantics)."""
    dn = ("NCHW", "OIHW", "NCHW")
    relu = lambda a: jnp.maximum(a, 0.0)
    h = relu(x)
    h = jax.lax.conv_general_dilated(h, w1, (1, 1), ((1, 1), (1, 1)),
                                     dimension_numbers=dn)
    h = h + b1[None, :, None, None]
    h = relu(h)
    h = jax.lax.conv_general_dilated(h, w2, (1, 1), ((1, 1), (1, 1)),
                                     dimension_numbers=dn)
    h = h + b2[None, :, None, None]
    return h + x


if __name__ == "__main__":
    N, C, H, W = 2, 4, 16, 16   # features = 4

    key = jax.random.PRNGKey(0)
    kx, kw1, kb1, kw2, kb2 = jax.random.split(key, 5)

    x = jax.random.normal(kx, (N, C, H, W), dtype=jnp.float32)
    # PyTorch-shaped conv parameters: (Cout, Cin, 3, 3), (Cout,).
    w1 = 0.1 * jax.random.normal(kw1, (C, C, 3, 3), dtype=jnp.float32)
    b1 = 0.1 * jax.random.normal(kb1, (C,), dtype=jnp.float32)
    w2 = 0.1 * jax.random.normal(kw2, (C, C, 3, 3), dtype=jnp.float32)
    b2 = 0.1 * jax.random.normal(kb2, (C,), dtype=jnp.float32)

    out = residual_conv_unit(x, w1, b1, w2, b2)
    out = jax.block_until_ready(out)

    ref = jax.block_until_ready(_reference(x, w1, b1, w2, b2))
    np.testing.assert_allclose(np.asarray(out), np.asarray(ref),
                               rtol=1e-5, atol=1e-5)

    print("KERNEL_OK")
</pallas_src>

<mosaic_0001>
module attributes {stable_mosaic.version = 11 : i64} {
  func.func @_rcu_kernel(%arg0: i32, %arg1: memref<1x8x256xf32, #tpu.memory_space<vmem>>, %arg2: memref<8x80xf32, #tpu.memory_space<vmem>>, %arg3: memref<8x80xf32, #tpu.memory_space<vmem>>, %arg4: memref<1x8x256xf32, #tpu.memory_space<vmem>>, %arg5: memref<80x256xf32, #tpu.memory_space<vmem>>) attributes {dimension_semantics = [#tpu.dimension_semantics<parallel>], iteration_bounds = array<i64: 2>, scalar_prefetch = 0 : i64, scratch_operands = 1 : i64, tpu.core_type = #tpu.core_type<tc>, window_params = [{transform_indices = @transform_0, window_bounds = array<i64: 1, 8, 256>}, {pipeline_mode = #tpu.pipeline_mode<synchronous>, transform_indices = @transform_1, window_bounds = array<i64: 8, 80>}, {pipeline_mode = #tpu.pipeline_mode<synchronous>, transform_indices = @transform_2, window_bounds = array<i64: 8, 80>}, {transform_indices = @transform_3, window_bounds = array<i64: 1, 8, 256>}]} {
    %0 = tpu.iota {dimensions = array<i32: 1>} : vector<1x256xi32>
    %c16_i32 = arith.constant 16 : i32
    %c0_i32 = arith.constant 0 : i32
    %1 = arith.cmpi eq, %c16_i32, %c0_i32 : i32
    %c1_i32 = arith.constant 1 : i32
    %2 = arith.select %1, %c1_i32, %c16_i32 : i32
    %3 = vector.broadcast %2 : i32 to vector<1x256xi32>
    %4 = arith.remsi %0, %3 : vector<1x256xi32>
    %c0_i32_0 = arith.constant 0 : i32
    %5 = vector.broadcast %c0_i32_0 : i32 to vector<1x256xi32>
    %6 = arith.cmpi ne, %4, %5 : vector<1x256xi32>
    %c0_i32_1 = arith.constant 0 : i32
    %7 = vector.broadcast %c0_i32_1 : i32 to vector<1x256xi32>
    %8 = arith.cmpi slt, %4, %7 : vector<1x256xi32>
    %c0_i32_2 = arith.constant 0 : i32
    %9 = arith.cmpi slt, %2, %c0_i32_2 : i32
    %10 = vector.broadcast %9 : i1 to vector<1x256xi1>
    %11 = vector.broadcast %10 : vector<1x256xi1> to vector<1x256xi1>
    %12 = arith.xori %8, %11 : vector<1x256xi1>
    %13 = arith.andi %12, %6 : vector<1x256xi1>
    %14 = vector.broadcast %2 : i32 to vector<1x256xi32>
    %15 = arith.addi %4, %14 : vector<1x256xi32>
    %16 = arith.select %13, %15, %4 : vector<1x256xi1>, vector<1x256xi32>
    %c1_i32_3 = arith.constant 1 : i32
    %17 = vector.broadcast %c1_i32_3 : i32 to vector<1x256xi32>
    %18 = arith.cmpi sge, %16, %17 : vector<1x256xi32>
    %19 = arith.extui %18 : vector<1x256xi1> to vector<1x256xi32>
    %20 = arith.sitofp %19 : vector<1x256xi32> to vector<1x256xf32>
    %c14_i32 = arith.constant 14 : i32
    %21 = vector.broadcast %c14_i32 : i32 to vector<1x256xi32>
    %22 = arith.cmpi sle, %16, %21 : vector<1x256xi32>
    %23 = arith.extui %22 : vector<1x256xi1> to vector<1x256xi32>
    %24 = arith.sitofp %23 : vector<1x256xi32> to vector<1x256xf32>
    %c16_i32_4 = arith.constant 16 : i32
    %25 = vector.broadcast %c16_i32_4 : i32 to vector<1x256xi32>
    %26 = arith.cmpi sge, %0, %25 : vector<1x256xi32>
    %27 = arith.extui %26 : vector<1x256xi1> to vector<1x256xi32>
    %28 = arith.sitofp %27 : vector<1x256xi32> to vector<1x256xf32>
    %c240_i32 = arith.constant 240 : i32
    %29 = vector.broadcast %c240_i32 : i32 to vector<1x256xi32>
    %30 = arith.cmpi slt, %0, %29 : vector<1x256xi32>
    %31 = arith.extui %30 : vector<1x256xi1> to vector<1x256xi32>
    %32 = arith.sitofp %31 : vector<1x256xi32> to vector<1x256xf32>
    %cst = arith.constant 1.000000e+00 : f32
    %33 = vector.broadcast %cst : f32 to vector<8x256xf32>
    %c72 = arith.constant 72 : index
    %c0 = arith.constant 0 : index
    %34 = vector.load %arg5[%c72, %c0] : memref<80x256xf32, #tpu.memory_space<vmem>>, vector<8x256xf32>
    tpu.vector_store %arg5[%c72, %c0], %33 {strides = array<i32>} : memref<80x256xf32, #tpu.memory_space<vmem>>, vector<8x256xf32>,
    %c0_5 = arith.constant 0 : index
    %c0_6 = arith.constant 0 : index
    %c0_7 = arith.constant 0 : index
    %35 = vector.load %arg1[%c0_5, %c0_6, %c0_7] : memref<1x8x256xf32, #tpu.memory_space<vmem>>, vector<1x8x256xf32>
    %36 = vector.shape_cast %35 : vector<1x8x256xf32> to vector<8x256xf32>
    %cst_8 = arith.constant 0.000000e+00 : f32
    %37 = vector.broadcast %cst_8 : f32 to vector<8x256xf32>
    %38 = arith.maximumf %36, %37 : vector<8x256xf32>
    %c1_i32_9 = arith.constant 1 : i32
    %39 = tpu.dynamic_rotate %38 by %c1_i32_9 dim 1 : vector<8x256xf32>, i32 -> vector<8x256xf32>
    %40 = vector.broadcast %20 : vector<1x256xf32> to vector<8x256xf32>
    %41 = arith.mulf %39, %40 : vector<8x256xf32>
    %c255_i32 = arith.constant 255 : i32
    %42 = tpu.dynamic_rotate %38 by %c255_i32 dim 1 : vector<8x256xf32>, i32 -> vector<8x256xf32>
    %43 = vector.broadcast %24 : vector<1x256xf32> to vector<8x256xf32>
    %44 = arith.mulf %42, %43 : vector<8x256xf32>
    %c16_i32_10 = arith.constant 16 : i32
    %45 = tpu.dynamic_rotate %41 by %c16_i32_10 dim 1 : vector<8x256xf32>, i32 -> vector<8x256xf32>
    %46 = vector.broadcast %28 : vector<1x256xf32> to vector<8x256xf32>
    %47 = arith.mulf %45, %46 : vector<8x256xf32>
    %c0_11 = arith.constant 0 : index
    %c0_12 = arith.constant 0 : index
    %48 = vector.load %arg5[%c0_11, %c0_12] : memref<80x256xf32, #tpu.memory_space<vmem>>, vector<8x256xf32>
    tpu.vector_store %arg5[%c0_11, %c0_12], %47 {strides = array<i32>} : memref<80x256xf32, #tpu.memory_space<vmem>>, vector<8x256xf32>,
    %c16_i32_13 = arith.constant 16 : i32
    %49 = tpu.dynamic_rotate %38 by %c16_i32_13 dim 1 : vector<8x256xf32>, i32 -> vector<8x256xf32>
    %50 = vector.broadcast %28 : vector<1x256xf32> to vector<8x256xf32>
    %51 = arith.mulf %49, %50 : vector<8x256xf32>
    %c8 = arith.constant 8 : index
    %c0_14 = arith.constant 0 : index
    %52 = vector.load %arg5[%c8, %c0_14] : memref<80x256xf32, #tpu.memory_space<vmem>>, vector<8x256xf32>
    tpu.vector_store %arg5[%c8, %c0_14], %51 {strides = array<i32>} : memref<80x256xf32, #tpu.memory_space<vmem>>, vector<8x256xf32>,
    %c16_i32_15 = arith.constant 16 : i32
    %53 = tpu.dynamic_rotate %44 by %c16_i32_15 dim 1 : vector<8x256xf32>, i32 -> vector<8x256xf32>
    %54 = vector.broadcast %28 : vector<1x256xf32> to vector<8x256xf32>
    %55 = arith.mulf %53, %54 : vector<8x256xf32>
    %c16 = arith.constant 16 : index
    %c0_16 = arith.constant 0 : index
    %56 = vector.load %arg5[%c16, %c0_16] : memref<80x256xf32, #tpu.memory_space<vmem>>, vector<8x256xf32>
    tpu.vector_store %arg5[%c16, %c0_16], %55 {strides = array<i32>} : memref<80x256xf32, #tpu.memory_space<vmem>>, vector<8x256xf32>,
    %c24 = arith.constant 24 : index
    %c0_17 = arith.constant 0 : index
    %57 = vector.load %arg5[%c24, %c0_17] : memref<80x256xf32, #tpu.memory_space<vmem>>, vector<8x256xf32>
    tpu.vector_store %arg5[%c24, %c0_17], %41 {strides = array<i32>} : memref<80x256xf32, #tpu.memory_space<vmem>>, vector<8x256xf32>,
    %c32 = arith.constant 32 : index
    %c0_18 = arith.constant 0 : index
    %58 = vector.load %arg5[%c32, %c0_18] : memref<80x256xf32, #tpu.memory_space<vmem>>, vector<8x256xf32>
    tpu.vector_store %arg5[%c32, %c0_18], %38 {strides = array<i32>} : memref<80x256xf32, #tpu.memory_space<vmem>>, vector<8x256xf32>,
    %c40 = arith.constant 40 : index
    %c0_19 = arith.constant 0 : index
    %59 = vector.load %arg5[%c40, %c0_19] : memref<80x256xf32, #tpu.memory_space<vmem>>, vector<8x256xf32>
    tpu.vector_store %arg5[%c40, %c0_19], %44 {strides = array<i32>} : memref<80x256xf32, #tpu.memory_space<vmem>>, vector<8x256xf32>,
    %c240_i32_20 = arith.constant 240 : i32
    %60 = tpu.dynamic_rotate %41 by %c240_i32_20 dim 1 : vector<8x256xf32>, i32 -> vector<8x256xf32>
    %61 = vector.broadcast %32 : vector<1x256xf32> to vector<8x256xf32>
    %62 = arith.mulf %60, %61 : vector<8x256xf32>
    %c48 = arith.constant 48 : index
    %c0_21 = arith.constant 0 : index
    %63 = vector.load %arg5[%c48, %c0_21] : memref<80x256xf32, #tpu.memory_space<vmem>>, vector<8x256xf32>
    tpu.vector_store %arg5[%c48, %c0_21], %62 {strides = array<i32>} : memref<80x256xf32, #tpu.memory_space<vmem>>, vector<8x256xf32>,
    %c240_i32_22 = arith.constant 240 : i32
    %64 = tpu.dynamic_rotate %38 by %c240_i32_22 dim 1 : vector<8x256xf32>, i32 -> vector<8x256xf32>
    %65 = vector.broadcast %32 : vector<1x256xf32> to vector<8x256xf32>
    %66 = arith.mulf %64, %65 : vector<8x256xf32>
    %c56 = arith.constant 56 : index
    %c0_23 = arith.constant 0 : index
    %67 = vector.load %arg5[%c56, %c0_23] : memref<80x256xf32, #tpu.memory_space<vmem>>, vector<8x256xf32>
    tpu.vector_store %arg5[%c56, %c0_23], %66 {strides = array<i32>} : memref<80x256xf32, #tpu.memory_space<vmem>>, vector<8x256xf32>,
    %c240_i32_24 = arith.constant 240 : i32
    %68 = tpu.dynamic_rotate %44 by %c240_i32_24 dim 1 : vector<8x256xf32>, i32 -> vector<8x256xf32>
    %69 = vector.broadcast %32 : vector<1x256xf32> to vector<8x256xf32>
    %70 = arith.mulf %68, %69 : vector<8x256xf32>
    %c64 = arith.constant 64 : index
    %c0_25 = arith.constant 0 : index
    %71 = vector.load %arg5[%c64, %c0_25] : memref<80x256xf32, #tpu.memory_space<vmem>>, vector<8x256xf32>
    tpu.vector_store %arg5[%c64, %c0_25], %70 {strides = array<i32>} : memref<80x256xf32, #tpu.memory_space<vmem>>, vector<8x256xf32>,
    %c0_26 = arith.constant 0 : index
    %c0_27 = arith.constant 0 : index
    %72 = vector.load %arg2[%c0_26, %c0_27] : memref<8x80xf32, #tpu.memory_space<vmem>>, vector<8x80xf32>
    %c0_28 = arith.constant 0 : index
    %c0_29 = arith.constant 0 : index
    %73 = vector.load %arg5[%c0_28, %c0_29] : memref<80x256xf32, #tpu.memory_space<vmem>>, vector<80x256xf32>
    %cst_30 = arith.constant dense<0.000000e+00> : vector<8x256xf32>
    %74 = tpu.matmul %72, %73, %cst_30 {dimension_numbers = #tpu.dot_dimension_numbers<[1], [0], [0], [1], [0, 0, 1, 1], [], []>} : vector<8x80xf32>, vector<80x256xf32>, vector<8x256xf32> -> vector<8x256xf32>
    %cst_31 = arith.constant 0.000000e+00 : f32
    %75 = vector.broadcast %cst_31 : f32 to vector<8x256xf32>
    %76 = arith.maximumf %74, %75 : vector<8x256xf32>
    %c1_i32_32 = arith.constant 1 : i32
    %77 = tpu.dynamic_rotate %76 by %c1_i32_32 dim 1 : vector<8x256xf32>, i32 -> vector<8x256xf32>
    %78 = vector.broadcast %20 : vector<1x256xf32> to vector<8x256xf32>
    %79 = arith.mulf %77, %78 : vector<8x256xf32>
    %c255_i32_33 = arith.constant 255 : i32
    %80 = tpu.dynamic_rotate %76 by %c255_i32_33 dim 1 : vector<8x256xf32>, i32 -> vector<8x256xf32>
    %81 = vector.broadcast %24 : vector<1x256xf32> to vector<8x256xf32>
    %82 = arith.mulf %80, %81 : vector<8x256xf32>
    %c16_i32_34 = arith.constant 16 : i32
    %83 = tpu.dynamic_rotate %79 by %c16_i32_34 dim 1 : vector<8x256xf32>, i32 -> vector<8x256xf32>
    %84 = vector.broadcast %28 : vector<1x256xf32> to vector<8x256xf32>
    %85 = arith.mulf %83, %84 : vector<8x256xf32>
    %c0_35 = arith.constant 0 : index
    %c0_36 = arith.constant 0 : index
    %86 = vector.load %arg5[%c0_35, %c0_36] : memref<80x256xf32, #tpu.memory_space<vmem>>, vector<8x256xf32>
    tpu.vector_store %arg5[%c0_35, %c0_36], %85 {strides = array<i32>} : memref<80x256xf32, #tpu.memory_space<vmem>>, vector<8x256xf32>,
    %c16_i32_37 = arith.constant 16 : i32
    %87 = tpu.dynamic_rotate %76 by %c16_i32_37 dim 1 : vector<8x256xf32>, i32 -> vector<8x256xf32>
    %88 = vector.broadcast %28 : vector<1x256xf32> to vector<8x256xf32>
    %89 = arith.mulf %87, %88 : vector<8x256xf32>
    %c8_38 = arith.constant 8 : index
    %c0_39 = arith.constant 0 : index
    %90 = vector.load %arg5[%c8_38, %c0_39] : memref<80x256xf32, #tpu.memory_space<vmem>>, vector<8x256xf32>
    tpu.vector_store %arg5[%c8_38, %c0_39], %89 {strides = array<i32>} : memref<80x256xf32, #tpu.memory_space<vmem>>, vector<8x256xf32>,
    %c16_i32_40 = arith.constant 16 : i32
    %91 = tpu.dynamic_rotate %82 by %c16_i32_40 dim 1 : vector<8x256xf32>, i32 -> vector<8x256xf32>
    %92 = vector.broadcast %28 : vector<1x256xf32> to vector<8x256xf32>
    %93 = arith.mulf %91, %92 : vector<8x256xf32>
    %c16_41 = arith.constant 16 : index
    %c0_42 = arith.constant 0 : index
    %94 = vector.load %arg5[%c16_41, %c0_42] : memref<80x256xf32, #tpu.memory_space<vmem>>, vector<8x256xf32>
    tpu.vector_store %arg5[%c16_41, %c0_42], %93 {strides = array<i32>} : memref<80x256xf32, #tpu.memory_space<vmem>>, vector<8x256xf32>,
    %c24_43 = arith.constant 24 : index
    %c0_44 = arith.constant 0 : index
    %95 = vector.load %arg5[%c24_43, %c0_44] : memref<80x256xf32, #tpu.memory_space<vmem>>, vector<8x256xf32>
    tpu.vector_store %arg5[%c24_43, %c0_44], %79 {strides = array<i32>} : memref<80x256xf32, #tpu.memory_space<vmem>>, vector<8x256xf32>,
    %c32_45 = arith.constant 32 : index
    %c0_46 = arith.constant 0 : index
    %96 = vector.load %arg5[%c32_45, %c0_46] : memref<80x256xf32, #tpu.memory_space<vmem>>, vector<8x256xf32>
    tpu.vector_store %arg5[%c32_45, %c0_46], %76 {strides = array<i32>} : memref<80x256xf32, #tpu.memory_space<vmem>>, vector<8x256xf32>,
    %c40_47 = arith.constant 40 : index
    %c0_48 = arith.constant 0 : index
    %97 = vector.load %arg5[%c40_47, %c0_48] : memref<80x256xf32, #tpu.memory_space<vmem>>, vector<8x256xf32>
    tpu.vector_store %arg5[%c40_47, %c0_48], %82 {strides = array<i32>} : memref<80x256xf32, #tpu.memory_space<vmem>>, vector<8x256xf32>,
    %c240_i32_49 = arith.constant 240 : i32
    %98 = tpu.dynamic_rotate %79 by %c240_i32_49 dim 1 : vector<8x256xf32>, i32 -> vector<8x256xf32>
    %99 = vector.broadcast %32 : vector<1x256xf32> to vector<8x256xf32>
    %100 = arith.mulf %98, %99 : vector<8x256xf32>
    %c48_50 = arith.constant 48 : index
    %c0_51 = arith.constant 0 : index
    %101 = vector.load %arg5[%c48_50, %c0_51] : memref<80x256xf32, #tpu.memory_space<vmem>>, vector<8x256xf32>
    tpu.vector_store %arg5[%c48_50, %c0_51], %100 {strides = array<i32>} : memref<80x256xf32, #tpu.memory_space<vmem>>, vector<8x256xf32>,
    %c240_i32_52 = arith.constant 240 : i32
    %102 = tpu.dynamic_rotate %76 by %c240_i32_52 dim 1 : vector<8x256xf32>, i32 -> vector<8x256xf32>
    %103 = vector.broadcast %32 : vector<1x256xf32> to vector<8x256xf32>
    %104 = arith.mulf %102, %103 : vector<8x256xf32>
    %c56_53 = arith.constant 56 : index
    %c0_54 = arith.constant 0 : index
    %105 = vector.load %arg5[%c56_53, %c0_54] : memref<80x256xf32, #tpu.memory_space<vmem>>, vector<8x256xf32>
    tpu.vector_store %arg5[%c56_53, %c0_54], %104 {strides = array<i32>} : memref<80x256xf32, #tpu.memory_space<vmem>>, vector<8x256xf32>,
    %c240_i32_55 = arith.constant 240 : i32
    %106 = tpu.dynamic_rotate %82 by %c240_i32_55 dim 1 : vector<8x256xf32>, i32 -> vector<8x256xf32>
    %107 = vector.broadcast %32 : vector<1x256xf32> to vector<8x256xf32>
    %108 = arith.mulf %106, %107 : vector<8x256xf32>
    %c64_56 = arith.constant 64 : index
    %c0_57 = arith.constant 0 : index
    %109 = vector.load %arg5[%c64_56, %c0_57] : memref<80x256xf32, #tpu.memory_space<vmem>>, vector<8x256xf32>
    tpu.vector_store %arg5[%c64_56, %c0_57], %108 {strides = array<i32>} : memref<80x256xf32, #tpu.memory_space<vmem>>, vector<8x256xf32>,
    %c0_58 = arith.constant 0 : index
    %c0_59 = arith.constant 0 : index
    %110 = vector.load %arg3[%c0_58, %c0_59] : memref<8x80xf32, #tpu.memory_space<vmem>>, vector<8x80xf32>
    %c0_60 = arith.constant 0 : index
    %c0_61 = arith.constant 0 : index
    %111 = vector.load %arg5[%c0_60, %c0_61] : memref<80x256xf32, #tpu.memory_space<vmem>>, vector<80x256xf32>
    %cst_62 = arith.constant dense<0.000000e+00> : vector<8x256xf32>
    %112 = tpu.matmul %110, %111, %cst_62 {dimension_numbers = #tpu.dot_dimension_numbers<[1], [0], [0], [1], [0, 0, 1, 1], [], []>} : vector<8x80xf32>, vector<80x256xf32>, vector<8x256xf32> -> vector<8x256xf32>
    %c0_63 = arith.constant 0 : index
    %c0_64 = arith.constant 0 : index
    %c0_65 = arith.constant 0 : index
    %113 = vector.load %arg1[%c0_63, %c0_64, %c0_65] : memref<1x8x256xf32, #tpu.memory_space<vmem>>, vector<1x8x256xf32>
    %114 = vector.shape_cast %113 : vector<1x8x256xf32> to vector<8x256xf32>
    %115 = arith.addf %112, %114 : vector<8x256xf32>
    %c0_66 = arith.constant 0 : index
    %c0_67 = arith.constant 0 : index
    %c0_68 = arith.constant 0 : index
    %116 = vector.load %arg4[%c0_66, %c0_67, %c0_68] : memref<1x8x256xf32, #tpu.memory_space<vmem>>, vector<1x8x256xf32>
    %117 = vector.shape_cast %116 : vector<1x8x256xf32> to vector<8x256xf32>
    %118 = vector.shape_cast %115 : vector<8x256xf32> to vector<1x8x256xf32>
    tpu.vector_store %arg4[%c0_66, %c0_67, %c0_68], %118 {strides = array<i32>} : memref<1x8x256xf32, #tpu.memory_space<vmem>>, vector<1x8x256xf32>,
    return
  }
  func.func @transform_0(%arg0: i32) -> (i32, i32, i32) {
    %c0_i32 = arith.constant 0 : i32
    %c0_i32_0 = arith.constant 0 : i32
    %c0_i32_1 = arith.constant 0 : i32
    return %arg0, %c0_i32, %c0_i32_0 : i32, i32, i32
  }
  func.func @transform_1(%arg0: i32) -> (i32, i32) {
    %c0_i32 = arith.constant 0 : i32
    %c0_i32_0 = arith.constant 0 : i32
    %c0_i32_1 = arith.constant 0 : i32
    return %c0_i32, %c0_i32_0 : i32, i32
  }
  func.func @transform_2(%arg0: i32) -> (i32, i32) {
    %c0_i32 = arith.constant 0 : i32
    %c0_i32_0 = arith.constant 0 : i32
    %c0_i32_1 = arith.constant 0 : i32
    return %c0_i32, %c0_i32_0 : i32, i32
  }
  func.func @transform_3(%arg0: i32) -> (i32, i32, i32) {
    %c0_i32 = arith.constant 0 : i32
    %c0_i32_0 = arith.constant 0 : i32
    %c0_i32_1 = arith.constant 0 : i32
    return %arg0, %c0_i32, %c0_i32_0 : i32, i32, i32
  }
}

</mosaic_0001>

<llo_original>
// kernel: tpu_custom_call.1
$region0: #{tpu_custom_call.1}
  #allocation0 [shape = 'u32[]', space=smem, size = 0x4, offset = 0x4, fixed_abs, tag = 'smem constant byte address 0x4 - core index']
  #allocation1 [shape = 'u32[72,128]{1,0:T(1,128)}', space=vmem, size = 0x9000, scoped, tag = 'internal scratch']
  #allocation2 [shape = 'f32[80,256]{1,0:T(8,128)}', space=vmem, size = 0x14000, scoped, tag = 'scratch operand']
  %s0 = inlined_call_operand.hbm [shape: f32[2,8,256], index: 0, kind: input, shape index: {}]
  %s1 = inlined_call_operand.hbm [shape: f32[8,80], index: 1, kind: input, shape index: {}]
  %s2 = inlined_call_operand.hbm [shape: f32[8,80], index: 2, kind: input, shape index: {}]
  %s3 = inlined_call_operand.hbm [shape: f32[2,8,256], index: 3, kind: output, shape index: {}]
  %s4 = sld [smem:[#allocation0]]
  $region57: #{tpu_custom_call.1} parent=0
    _
  %s6 = ssub.s32 1, %s4
  %s7 = scalar_select 0, %s6, %s4
  $region1: #{tpu_custom_call.1} parent=0
    #allocation3 [shape = 'u8[16384]{0}', space=vmem, size = 0x4000, scoped, tag = 'input window, operand 0']
    #allocation4 [shape = 's32[2]{0}', space=sflag, size = 0x8, scoped, tag = 'scoped memory for tpu_custom_call.1']
    #allocation5 [shape = 's32[2]{0}', space=sflag, size = 0x8, scoped, tag = 'scoped memory for tpu_custom_call.1']
    #allocation6 [shape = 'u8[4096]{0}', space=vmem, size = 0x1000, scoped, tag = 'input window, operand 1, single buffered']
    #allocation7 [shape = 's32[1]{0}', space=sflag, size = 0x4, scoped, tag = 'scoped memory for tpu_custom_call.1']
    #allocation8 [shape = 'u8[4096]{0}', space=vmem, size = 0x1000, scoped, tag = 'input window, operand 2, single buffered']
    #allocation9 [shape = 'u8[16384]{0}', space=vmem, size = 0x4000, scoped, tag = 'output window, operand 0']
    %8 = vsyncpa [#allocation4], 0
    %s9 = scalar_lea.sflag [#allocation4], 1
    %10 = vsyncpa %s9, 0
    %11 = vsyncpa [#allocation7], 0
    %12 = vsyncpa [#allocation5], 0
    %s13 = scalar_lea.sflag [#allocation5], 1
    %14 = vsyncpa %s13, 0
    loop: start=0, step=1, limit=4
    $region2: #{tpu_custom_call.1} parent=1 // loop_pre_header
      _
    $region3: #{tpu_custom_call.1} parent=1 // loop_header
      %s16 = sphi 0, %s20
      %p17 = scmp.ge.s32.totalorder %s16, 4
      %s26 = sphi 0, %s28
      %s29 = sphi 0, %s26
      %s30 = sphi 0, %s29
      %s46 = sphi 0, %s30
      %s50 = sphi 0, %s50
      %s52 = sphi 0, %s50
      %s53 = sphi 0, %s52
      %s67 = sphi 0, %s53
      %s71 = sphi 0, %s71
      %s73 = sphi 0, %s71
      %s74 = sphi 0, %s73
      %s88 = sphi 0, %s74
      %s94 = sphi 0, %s96
      %s97 = sphi 0, %s94
      %s98 = sphi 0, %s97
      %s114 = sphi 0, %s98
    $region4: #{tpu_custom_call.1} parent=1 // loop_header_branch
      %19 = sbr.rel (%p17) target = $region8
    $region5: #{tpu_custom_call.1} parent=1 // loop_body
      %s21 = ssub.s32 %s16, 1
      %s22 = ssub.s32 %s16, 2
      %s23 = sadd.s32 %s16, 1
      %s24 = ssub.s32 %s16, %s23
      %p25 = scmp.eq.s32.totalorder %s24, 0
      %s27 = sadd.s32 %s26, 1
      %s28 = scalar_select %p25, %s26, %s27
      %p31 = pneg %p25
      %p32 = scmp.eq.s32.totalorder %s16, 1
      %p33 = por %p31, %p32
      %p34 = scmp.ne.s32.totalorder %s26, %s29
      %p35 = scmp.eq.s32.totalorder %s16, 0
      %p36 = por %p34, %p35
      %p37 = scmp.ne.s32.totalorder %s26, %s29
      %p38 = scmp.eq.s32.totalorder %s21, 1
      %p39 = por %p37, %p38
      %p40 = scmp.ne.s32.totalorder %s29, %s30
      %p41 = scmp.eq.s32.totalorder %s21, 0
      %p42 = por %p40, %p41
      %p43 = scmp.ne.s32.totalorder %s29, %s30
      %p44 = scmp.eq.s32.totalorder %s22, 1
      %p45 = por %p43, %p44
      %p47 = scmp.ne.s32.totalorder %s30, %s46
      %p48 = scmp.eq.s32.totalorder %s22, 0
      %p49 = por %p47, %p48
      %s51 = sadd.s32 %s50, 1
      %p54 = scmp.eq.s32.totalorder %s16, 1
      %p55 = scmp.ne.s32.totalorder %s50, %s52
      %p56 = scmp.eq.s32.totalorder %s16, 0
      %p57 = por %p55, %p56
      %p58 = scmp.ne.s32.totalorder %s50, %s52
      %p59 = scmp.eq.s32.totalorder %s21, 1
      %p60 = por %p58, %p59
      %p61 = scmp.ne.s32.totalorder %s52, %s53
      %p62 = scmp.eq.s32.totalorder %s21, 0
      %p63 = por %p61, %p62
      %p64 = scmp.ne.s32.totalorder %s52, %s53
      %p65 = scmp.eq.s32.totalorder %s22, 1
      %p66 = por %p64, %p65
      %p68 = scmp.ne.s32.totalorder %s53, %s67
      %p69 = scmp.eq.s32.totalorder %s22, 0
      %p70 = por %p68, %p69
      %s72 = sadd.s32 %s71, 1
      %p75 = scmp.eq.s32.totalorder %s16, 1
      %p76 = scmp.ne.s32.totalorder %s71, %s73
      %p77 = scmp.eq.s32.totalorder %s16, 0
      %p78 = por %p76, %p77
      %p79 = scmp.ne.s32.totalorder %s71, %s73
      %p80 = scmp.eq.s32.totalorder %s21, 1
      %p81 = por %p79, %p80
      %p82 = scmp.ne.s32.totalorder %s73, %s74
      %p83 = scmp.eq.s32.totalorder %s21, 0
      %p84 = por %p82, %p83
      %p85 = scmp.ne.s32.totalorder %s73, %s74
      %p86 = scmp.eq.s32.totalorder %s22, 1
      %p87 = por %p85, %p86
      %p89 = scmp.ne.s32.totalorder %s74, %s88
      %p90 = scmp.eq.s32.totalorder %s22, 0
      %p91 = por %p89, %p90
      %s92 = ssub.s32 %s16, %s23
      %p93 = scmp.eq.s32.totalorder %s92, 0
      %s95 = sadd.s32 %s94, 1
      %s96 = scalar_select %p93, %s94, %s95
      %p99 = pneg %p93
      %p100 = scmp.eq.s32.totalorder %s16, 1
      %p101 = por %p99, %p100
      %p102 = scmp.ne.s32.totalorder %s94, %s97
      %p103 = scmp.eq.s32.totalorder %s16, 0
      %p104 = por %p102, %p103
      %p105 = scmp.ne.s32.totalorder %s94, %s97
      %p106 = scmp.eq.s32.totalorder %s21, 1
      %p107 = por %p105, %p106
      %p108 = scmp.ne.s32.totalorder %s97, %s98
      %p109 = scmp.eq.s32.totalorder %s21, 0
      %p110 = por %p108, %p109
      %p111 = scmp.ne.s32.totalorder %s97, %s98
      %p112 = scmp.eq.s32.totalorder %s22, 1
      %p113 = por %p111, %p112
      %p115 = scmp.ne.s32.totalorder %s98, %s114
      %p116 = scmp.eq.s32.totalorder %s22, 0
      %p117 = por %p115, %p116
      %p118 = scmp.le.s32.totalorder 1, %s16
      %p119 = scmp.lt.s32.totalorder %s16, 3
      %p120 = pnand %p118, %p119
      %p121 = pneg %p120
      // Predicated region
      $region9: #{tpu_custom_call.1} parent=5 // pred_check
        _
      $region10: #{tpu_custom_call.1} parent=5 // pred_check_branch
        %123 = sbr.rel (%p120) target = $region12
      $region11: #{tpu_custom_call.1} parent=5 // pred_region
        %s124 = ssub.s32 %s16, 1
        // Predicated region
        $region13: #{tpu_custom_call.1} parent=11 // pred_check
          %p125 = pneg %p63
        $region14: #{tpu_custom_call.1} parent=11 // pred_check_branch
          %127 = sbr.rel (%p125) target = $region16
        $region15: #{tpu_custom_call.1} parent=11 // pred_region
          %129 = vsyncadd [#allocation7], 0
          %s131 = sshll.u32 %s1, 4
          %s132 = int_to_ptr.hbm [resolvable:$true] %s131
          %s133 = sshll.u32 [#allocation6], 4
          %s134 = int_to_ptr.vmem [resolvable:$true] %s133
          %136 = dma.hbm_to_vmem [thread:$0]  %s132, 128, %s134, [#allocation7]
        $region16: #{tpu_custom_call.1} parent=11 // pred_fallthru
          _
        // Predicated region
        $region17: #{tpu_custom_call.1} parent=11 // pred_check
          %p137 = pneg %p84
        $region18: #{tpu_custom_call.1} parent=11 // pred_check_branch
          %139 = sbr.rel (%p137) target = $region20
        $region19: #{tpu_custom_call.1} parent=11 // pred_region
          %141 = vsyncadd [#allocation7], 0
          %s143 = sshll.u32 %s2, 4
          %s144 = int_to_ptr.hbm [resolvable:$true] %s143
          %s145 = sshll.u32 [#allocation8], 4
          %s146 = int_to_ptr.vmem [resolvable:$true] %s145
          %148 = dma.hbm_to_vmem [thread:$0]  %s144, 128, %s146, [#allocation7]
        $region20: #{tpu_custom_call.1} parent=11 // pred_fallthru
          _
      $region12: #{tpu_custom_call.1} parent=5 // pred_fallthru
        _
      %p149 = scmp.lt.s32.totalorder %s16, 2
      // Predicated region
      $region21: #{tpu_custom_call.1} parent=5 // pred_check
        %p150 = pneg %p149
      $region22: #{tpu_custom_call.1} parent=5 // pred_check_branch
        %152 = sbr.rel (%p150) target = $region24
      $region23: #{tpu_custom_call.1} parent=5 // pred_region
        // Predicated region
        $region25: #{tpu_custom_call.1} parent=23 // pred_check
          %p153 = pneg %p36
        $region26: #{tpu_custom_call.1} parent=23 // pred_check_branch
          %155 = sbr.rel (%p153) target = $region28
        $region27: #{tpu_custom_call.1} parent=23 // pred_region
          %s156 = sand.u32 %s26, 1
          %s157 = scalar_lea.sflag [#allocation4], %s156
          %s158 = sand.u32 %s26, 1
          %s159 = smul.addr %s158, 16
          %s160 = scalar_lea.vmem [#allocation3], %s159
          %162 = vsyncadd %s157, 0
          %s163 = smul.addr %s16, 2
          %s164 = smul.addr %s163, 8
          %s165 = scalar_lea.hbm %s0, %s164
          %s167 = sshll.u32 %s165, 4
          %s168 = int_to_ptr.hbm [resolvable:$true] %s167
          %s169 = sshll.u32 %s160, 4
          %s170 = int_to_ptr.vmem [resolvable:$true] %s169
          %172 = dma.hbm_to_vmem [thread:$0]  %s168, 256, %s170, %s157
        $region28: #{tpu_custom_call.1} parent=23 // pred_fallthru
          _
      $region24: #{tpu_custom_call.1} parent=5 // pred_fallthru
        _
      %p173 = scmp.le.s32.totalorder 1, %s16
      %p174 = scmp.lt.s32.totalorder %s16, 3
      %p175 = pnand %p173, %p174
      %p176 = pneg %p175
      // Predicated region
      $region29: #{tpu_custom_call.1} parent=5 // pred_check
        _
      $region30: #{tpu_custom_call.1} parent=5 // pred_check_branch
        %178 = sbr.rel (%p175) target = $region32
      $region31: #{tpu_custom_call.1} parent=5 // pred_region
        %s179 = ssub.s32 %s16, 1
        %s180 = sand.u32 %s29, 1
        %s181 = scalar_lea.sflag [#allocation4], %s180
        %s182 = sand.u32 %s29, 1
        %s183 = smul.addr %s182, 16
        %s184 = scalar_lea.vmem [#allocation3], %s183
        // Predicated region
        $region33: #{tpu_custom_call.1} parent=31 // pred_check
          %p185 = pneg %p42
        $region34: #{tpu_custom_call.1} parent=31 // pred_check_branch
          %187 = sbr.rel (%p185) target = $region36
        $region35: #{tpu_custom_call.1} parent=31 // pred_region
          %189 = dma.done %s181, 256
        $region36: #{tpu_custom_call.1} parent=31 // pred_fallthru
          _
        // Predicated region
        $region37: #{tpu_custom_call.1} parent=31 // pred_check
          %p190 = pneg %p63
        $region38: #{tpu_custom_call.1} parent=31 // pred_check_branch
          %192 = sbr.rel (%p190) target = $region40
        $region39: #{tpu_custom_call.1} parent=31 // pred_region
          %194 = dma.done [#allocation7], 128
        $region40: #{tpu_custom_call.1} parent=31 // pred_fallthru
          _
        // Predicated region
        $region41: #{tpu_custom_call.1} parent=31 // pred_check
          %p195 = pneg %p84
        $region42: #{tpu_custom_call.1} parent=31 // pred_check_branch
          %197 = sbr.rel (%p195) target = $region44
        $region43: #{tpu_custom_call.1} parent=31 // pred_region
          %199 = dma.done [#allocation7], 128
        $region44: #{tpu_custom_call.1} parent=31 // pred_fallthru
          _
        %s200 = sand.u32 %s29, 1
        %s201 = scalar_lea.sflag [#allocation4], %s200
        %s202 = sand.u32 %s29, 1
        %s203 = smul.addr %s202, 16
        %s204 = scalar_lea.vmem [#allocation3], %s203
        %p205 = pneg %p42
        %p206 = pneg %p39
        %p207 = pneg %p63
        %p208 = pneg %p60
        %p209 = pneg %p84
        %p210 = pneg %p81
        %p211 = pneg %p110
        %p212 = pneg %p107
        %s213 = sand.u32 %s97, 1
        %s214 = scalar_lea.sflag [#allocation5], %s213
        %s215 = sand.u32 %s97, 1
        %s216 = smul.addr %s215, 16
        %s217 = scalar_lea.vmem [#allocation9], %s216
        %v218 = vlaneseq
        %v219 = vand.u32 %v218, 127
        %v220 = vadd.s32 %v219, 128
        %vm221 = vcmp.lt.s32.totalorder %v219, 0
        %v222 = vsub.s32 0, %v219
        %v223 = vsel %vm221, %v222, %v219
        %v224 = vshrl.u32 %v223, 4
        %v225 = vand.u32 %v223, 15
        %v226 = vsub.s32 0, %v225
        %v227 = vsel %vm221, %v226, %v225
        %vm228 = vcmp.lt.s32.totalorder %v220, 0
        %v229 = vsub.s32 0, %v220
        %v230 = vsel %vm228, %v229, %v220
        %v231 = vshrl.u32 %v230, 4
        %v232 = vand.u32 %v230, 15
        %v233 = vsub.s32 0, %v232
        %v234 = vsel %vm228, %v233, %v232
        %vm235 = vcmp.ne.s32.totalorder %v227, 0
        %vm236 = vcmp.ne.s32.totalorder %v234, 0
        %vm237 = vcmp.lt.s32.totalorder %v227, 0
        %vm238 = vcmp.lt.s32.totalorder %v234, 0
        %vm239 = vmand %vm237, %vm235
        %vm240 = vmand %vm238, %vm236
        %v241 = vadd.s32 %v227, 16
        %v242 = vadd.s32 %v234, 16
        %v243 = vsel %vm239, %v241, %v227
        %v244 = vsel %vm240, %v242, %v234
        %vm245 = vcmp.ge.s32.totalorder %v243, 1
        %vm246 = vcmp.ge.s32.totalorder %v244, 1
        %v247 = vsel %vm245, 1, 0
        %v248 = vsel %vm246, 1, 0
        %v249 = vcvt.s32.f32 %v247
        %v250 = vcvt.s32.f32 %v248
        %vm251 = vcmp.le.s32.totalorder %v243, 14
        %vm252 = vcmp.le.s32.totalorder %v244, 14
        %v253 = vsel %vm251, 1, 0
        %v254 = vsel %vm252, 1, 0
        %v255 = vcvt.s32.f32 %v253
        %v256 = vcvt.s32.f32 %v254
        %vm257 = vcmp.ge.s32.totalorder %v219, 16
        %vm258 = vcmp.ge.s32.totalorder %v220, 16
        %v259 = vsel %vm257, 1, 0
        %v260 = vsel %vm258, 1, 0
        %v261 = vcvt.s32.f32 %v259
        %v262 = vcvt.s32.f32 %v260
        %vm263 = vcmp.lt.s32.totalorder %v219, 240
        %vm264 = vcmp.lt.s32.totalorder %v220, 240
        %v265 = vsel %vm263, 1, 0
        %v266 = vsel %vm264, 1, 0
        %v267 = vcvt.s32.f32 %v265
        %v268 = vcvt.s32.f32 %v266
        %269 = vst [vmem:[#allocation2 + $0x90] sm:$0xff] 1.0
        %270 = vst [vmem:[#allocation2 + $0x98] sm:$0xff] 1.0
        %v271 = vld [vmem:[%s184] sm:$0xff]
        %v272 = vld [vmem:[%s184 + $0x8] sm:$0xff]
        %v273 = vmax.f32 %v271, 0.0
        %v274 = vmax.f32 %v272, 0.0
        %275 = vrot.lane.b32.xlu0 %v273, 1
        %v276 = vpop.permute.xlu0 %275
        %277 = vrot.lane.b32.xlu0 %v274, 1
        %v278 = vpop.permute.xlu0 %277
        %vm279 = vcmp.lt.s32.totalorder %v219, 1
        %v280 = vsel %vm279, %v276, %v278
        %v281 = vsel %vm279, %v278, %v276
        %v282 = vmul.f32 %v281, %v249
        %v283 = vmul.f32 %v280, %v250
        %284 = vrot.lane.b32.xlu0 %v273, 127
        %v285 = vpop.permute.xlu0 %284
        %286 = vrot.lane.b32.xlu0 %v274, 127
        %v287 = vpop.permute.xlu0 %286
        %vm288 = vcmp.lt.s32.totalorder %v219, 127
        %v289 = vsel %vm288, %v285, %v287
        %v290 = vsel %vm288, %v287, %v285
        %v291 = vmul.f32 %v289, %v255
        %v292 = vmul.f32 %v290, %v256
        %293 = vrot.lane.b32.xlu0 %v282, 16
        %v294 = vpop.permute.xlu0 %293
        %295 = vrot.lane.b32.xlu0 %v283, 16
        %v296 = vpop.permute.xlu0 %295
        %vm297 = vcmp.lt.s32.totalorder %v219, 16
        %v298 = vsel %vm297, %v294, %v296
        %v299 = vsel %vm297, %v296, %v294
        %v300 = vmul.f32 %v299, %v261
        %v301 = vmul.f32 %v298, %v262
        %302 = vst [vmem:[#allocation2] sm:$0xff] %v300
        %303 = vst [vmem:[#allocation2 + $0x8] sm:$0xff] %v301
        %304 = vrot.lane.b32.xlu0 %v273, 16
        %v305 = vpop.permute.xlu0 %304
        %306 = vrot.lane.b32.xlu0 %v274, 16
        %v307 = vpop.permute.xlu0 %306
        %v308 = vsel %vm297, %v305, %v307
        %v309 = vsel %vm297, %v307, %v305
        %v310 = vmul.f32 %v309, %v261
        %v311 = vmul.f32 %v308, %v262
        %312 = vst [vmem:[#allocation2 + $0x10] sm:$0xff] %v310
        %313 = vst [vmem:[#allocation2 + $0x18] sm:$0xff] %v311
        %314 = vrot.lane.b32.xlu0 %v291, 16
        %v315 = vpop.permute.xlu0 %314
        %316 = vrot.lane.b32.xlu0 %v292, 16
        %v317 = vpop.permute.xlu0 %316
        %v318 = vsel %vm297, %v315, %v317
        %v319 = vsel %vm297, %v317, %v315
        %v320 = vmul.f32 %v319, %v261
        %v321 = vmul.f32 %v318, %v262
        %322 = vst [vmem:[#allocation2 + $0x20] sm:$0xff] %v320
        %323 = vst [vmem:[#allocation2 + $0x28] sm:$0xff] %v321
        %324 = vst [vmem:[#allocation2 + $0x30] sm:$0xff] %v282
        %325 = vst [vmem:[#allocation2 + $0x38] sm:$0xff] %v283
        %326 = vst [vmem:[#allocation2 + $0x40] sm:$0xff] %v273
        %327 = vst [vmem:[#allocation2 + $0x48] sm:$0xff] %v274
        %328 = vst [vmem:[#allocation2 + $0x50] sm:$0xff] %v291
        %329 = vst [vmem:[#allocation2 + $0x58] sm:$0xff] %v292
        %330 = vrot.lane.b32.xlu0 %v282, 112
        %v331 = vpop.permute.xlu0 %330
        %332 = vrot.lane.b32.xlu0 %v283, 112
        %v333 = vpop.permute.xlu0 %332
        %vm334 = vcmp.lt.s32.totalorder %v219, 112
        %v335 = vsel %vm334, %v331, %v333
        %v336 = vsel %vm334, %v333, %v331
        %v337 = vmul.f32 %v335, %v267
        %v338 = vmul.f32 %v336, %v268
        %339 = vst [vmem:[#allocation2 + $0x60] sm:$0xff] %v337
        %340 = vst [vmem:[#allocation2 + $0x68] sm:$0xff] %v338
        %341 = vrot.lane.b32.xlu0 %v273, 112
        %v342 = vpop.permute.xlu0 %341
        %343 = vrot.lane.b32.xlu0 %v274, 112
        %v344 = vpop.permute.xlu0 %343
        %v345 = vsel %vm334, %v342, %v344
        %v346 = vsel %vm334, %v344, %v342
        %v347 = vmul.f32 %v345, %v267
        %v348 = vmul.f32 %v346, %v268
        %349 = vst [vmem:[#allocation2 + $0x70] sm:$0xff] %v347
        %350 = vst [vmem:[#allocation2 + $0x78] sm:$0xff] %v348
        %351 = vrot.lane.b32.xlu0 %v291, 112
        %v352 = vpop.permute.xlu0 %351
        %353 = vrot.lane.b32.xlu0 %v292, 112
        %v354 = vpop.permute.xlu0 %353
        %v355 = vsel %vm334, %v352, %v354
        %v356 = vsel %vm334, %v354, %v352
        %v357 = vmul.f32 %v355, %v267
        %v358 = vmul.f32 %v356, %v268
        %359 = vst [vmem:[#allocation2 + $0x80] sm:$0xff] %v357
        %360 = vst [vmem:[#allocation2 + $0x88] sm:$0xff] %v358
        %v361 = vld [vmem:[#allocation6] sm:$0xff]
        %v362 = vld [vmem:[#allocation2] sm:$0xff]
        %v363 = vld [vmem:[#allocation2 + $0x8] sm:$0xff]
        %v364 = vld [vmem:[#allocation2 + $0x10] sm:$0xff]
        %v365 = vld [vmem:[#allocation2 + $0x18] sm:$0xff]
        %v366 = vld [vmem:[#allocation2 + $0x20] sm:$0xff]
        %v367 = vld [vmem:[#allocation2 + $0x28] sm:$0xff]
        %v368 = vld [vmem:[#allocation2 + $0x30] sm:$0xff]
        %v369 = vld [vmem:[#allocation2 + $0x38] sm:$0xff]
        %v370 = vld [vmem:[#allocation2 + $0x40] sm:$0xff]
        %v371 = vld [vmem:[#allocation2 + $0x48] sm:$0xff]
        %v372 = vld [vmem:[#allocation2 + $0x50] sm:$0xff]
        %v373 = vld [vmem:[#allocation2 + $0x58] sm:$0xff]
        %v374 = vld [vmem:[#allocation2 + $0x60] sm:$0xff]
        %v375 = vld [vmem:[#allocation2 + $0x68] sm:$0xff]
        %v376 = vld [vmem:[#allocation2 + $0x70] sm:$0xff]
        %v377 = vld [vmem:[#allocation2 + $0x78] sm:$0xff]
        %v378 = vld [vmem:[#allocation2 + $0x80] sm:$0xff]
        %v379 = vld [vmem:[#allocation2 + $0x88] sm:$0xff]
        %v380 = vld [vmem:[#allocation2 + $0x90] sm:$0xff]
        %v381 = vld [vmem:[#allocation2 + $0x98] sm:$0xff]
        %vm382 = vcmask 654336
        %v384 = vsel %vm382, %v361, 0
        %386 = vmatpush.msra.mxu0 0.0
        %387 = vmatpush.msra.mxu0 0.0
        %388 = vmatpush.msra.mxu0 0.0
        %389 = vmatpush.msra.mxu0 0.0
        %390 = vmatpush.msra.mxu0 0.0
        %391 = vmatpush.msra.mxu0 0.0
        %392 = vmatpush.msra.mxu0 %v380
        %393 = vmatpush.msra.mxu0 %v378
        %394 = vmatpush.msra.mxu0 %v376
        %395 = vmatpush.msra.mxu0 %v374
        %396 = vmatpush.msra.mxu0 %v372
        %397 = vmatpush.msra.mxu0 %v370
        %398 = vmatpush.msra.mxu0 %v368
        %399 = vmatpush.msra.mxu0 %v366
        %400 = vmatpush.msra.mxu0 %v364
        %401 = vmatpush.msra.mxu0 %v362
        %402 = vmatmul.f32.gmra.mxu0 %v384
        %v403 = vpop.f32.mrf.mxu0
        %v404 = vadd.f32 0.0, %v403
        %405 = vdwg.mxu0
        %406 = vmatpush.msra.mxu0 0.0
        %407 = vmatpush.msra.mxu0 0.0
        %408 = vmatpush.msra.mxu0 0.0
        %409 = vmatpush.msra.mxu0 0.0
        %410 = vmatpush.msra.mxu0 0.0
        %411 = vmatpush.msra.mxu0 0.0
        %412 = vmatpush.msra.mxu0 %v381
        %413 = vmatpush.msra.mxu0 %v379
        %414 = vmatpush.msra.mxu0 %v377
        %415 = vmatpush.msra.mxu0 %v375
        %416 = vmatpush.msra.mxu0 %v373
        %417 = vmatpush.msra.mxu0 %v371
        %418 = vmatpush.msra.mxu0 %v369
        %419 = vmatpush.msra.mxu0 %v367
        %420 = vmatpush.msra.mxu0 %v365
        %421 = vmatpush.msra.mxu0 %v363
        %422 = vmatmul.f32.gmra.mxu0 %v384
        %v423 = vpop.f32.mrf.mxu0
        %v424 = vadd.f32 0.0, %v423
        %425 = vdwg.mxu0
        %v426 = vmax.f32 %v404, 0.0
        %v427 = vmax.f32 %v424, 0.0
        %428 = vrot.lane.b32.xlu0 %v426, 1
        %v429 = vpop.permute.xlu0 %428
        %430 = vrot.lane.b32.xlu0 %v427, 1
        %v431 = vpop.permute.xlu0 %430
        %v432 = vsel %vm279, %v429, %v431
        %v433 = vsel %vm279, %v431, %v429
        %v434 = vmul.f32 %v433, %v249
        %v435 = vmul.f32 %v432, %v250
        %436 = vrot.lane.b32.xlu0 %v426, 127
        %v437 = vpop.permute.xlu0 %436
        %438 = vrot.lane.b32.xlu0 %v427, 127
        %v439 = vpop.permute.xlu0 %438
        %v440 = vsel %vm288, %v437, %v439
        %v441 = vsel %vm288, %v439, %v437
        %v442 = vmul.f32 %v440, %v255
        %v443 = vmul.f32 %v441, %v256
        %444 = vrot.lane.b32.xlu0 %v434, 16
        %v445 = vpop.permute.xlu0 %444
        %446 = vrot.lane.b32.xlu0 %v435, 16
        %v447 = vpop.permute.xlu0 %446
        %v448 = vsel %vm297, %v445, %v447
        %v449 = vsel %vm297, %v447, %v445
        %v450 = vmul.f32 %v449, %v261
        %v451 = vmul.f32 %v448, %v262
        %452 = vst [vmem:[#allocation2] sm:$0xff] %v450
        %453 = vst [vmem:[#allocation2 + $0x8] sm:$0xff] %v451
        %454 = vrot.lane.b32.xlu0 %v426, 16
        %v455 = vpop.permute.xlu0 %454
        %456 = vrot.lane.b32.xlu0 %v427, 16
        %v457 = vpop.permute.xlu0 %456
        %v458 = vsel %vm297, %v455, %v457
        %v459 = vsel %vm297, %v457, %v455
        %v460 = vmul.f32 %v459, %v261
        %v461 = vmul.f32 %v458, %v262
        %462 = vst [vmem:[#allocation2 + $0x10] sm:$0xff] %v460
        %463 = vst [vmem:[#allocation2 + $0x18] sm:$0xff] %v461
        %464 = vrot.lane.b32.xlu0 %v442, 16
        %v465 = vpop.permute.xlu0 %464
        %466 = vrot.lane.b32.xlu0 %v443, 16
        %v467 = vpop.permute.xlu0 %466
        %v468 = vsel %vm297, %v465, %v467
        %v469 = vsel %vm297, %v467, %v465
        %v470 = vmul.f32 %v469, %v261
        %v471 = vmul.f32 %v468, %v262
        %472 = vst [vmem:[#allocation2 + $0x20] sm:$0xff] %v470
        %473 = vst [vmem:[#allocation2 + $0x28] sm:$0xff] %v471
        %474 = vst [vmem:[#allocation2 + $0x30] sm:$0xff] %v434
        %475 = vst [vmem:[#allocation2 + $0x38] sm:$0xff] %v435
        %476 = vst [vmem:[#allocation2 + $0x40] sm:$0xff] %v426
        %477 = vst [vmem:[#allocation2 + $0x48] sm:$0xff] %v427
        %478 = vst [vmem:[#allocation2 + $0x50] sm:$0xff] %v442
        %479 = vst [vmem:[#allocation2 + $0x58] sm:$0xff] %v443
        %480 = vrot.lane.b32.xlu0 %v434, 112
        %v481 = vpop.permute.xlu0 %480
        %482 = vrot.lane.b32.xlu0 %v435, 112
        %v483 = vpop.permute.xlu0 %482
        %v484 = vsel %vm334, %v481, %v483
        %v485 = vsel %vm334, %v483, %v481
        %v486 = vmul.f32 %v484, %v267
        %v487 = vmul.f32 %v485, %v268
        %488 = vst [vmem:[#allocation2 + $0x60] sm:$0xff] %v486
        %489 = vst [vmem:[#allocation2 + $0x68] sm:$0xff] %v487
        %490 = vrot.lane.b32.xlu0 %v426, 112
        %v491 = vpop.permute.xlu0 %490
        %492 = vrot.lane.b32.xlu0 %v427, 112
        %v493 = vpop.permute.xlu0 %492
        %v494 = vsel %vm334, %v491, %v493
        %v495 = vsel %vm334, %v493, %v491
        %v496 = vmul.f32 %v494, %v267
        %v497 = vmul.f32 %v495, %v268
        %498 = vst [vmem:[#allocation2 + $0x70] sm:$0xff] %v496
        %499 = vst [vmem:[#allocation2 + $0x78] sm:$0xff] %v497
        %500 = vrot.lane.b32.xlu0 %v442, 112
        %v501 = vpop.permute.xlu0 %500
        %502 = vrot.lane.b32.xlu0 %v443, 112
        %v503 = vpop.permute.xlu0 %502
        %v504 = vsel %vm334, %v501, %v503
        %v505 = vsel %vm334, %v503, %v501
        %v506 = vmul.f32 %v504, %v267
        %v507 = vmul.f32 %v505, %v268
        %508 = vst [vmem:[#allocation2 + $0x80] sm:$0xff] %v506
        %509 = vst [vmem:[#allocation2 + $0x88] sm:$0xff] %v507
        %v510 = vld [vmem:[#allocation8] sm:$0xff]
        %v511 = vld [vmem:[#allocation2] sm:$0xff]
        %v512 = vld [vmem:[#allocation2 + $0x8] sm:$0xff]
        %v513 = vld [vmem:[#allocation2 + $0x10] sm:$0xff]
        %v514 = vld [vmem:[#allocation2 + $0x18] sm:$0xff]
        %v515 = vld [vmem:[#allocation2 + $0x20] sm:$0xff]
        %v516 = vld [vmem:[#allocation2 + $0x28] sm:$0xff]
        %v517 = vld [vmem:[#allocation2 + $0x30] sm:$0xff]
        %v518 = vld [vmem:[#allocation2 + $0x38] sm:$0xff]
        %v519 = vld [vmem:[#allocation2 + $0x40] sm:$0xff]
        %v520 = vld [vmem:[#allocation2 + $0x48] sm:$0xff]
        %v521 = vld [vmem:[#allocation2 + $0x50] sm:$0xff]
        %v522 = vld [vmem:[#allocation2 + $0x58] sm:$0xff]
        %v523 = vld [vmem:[#allocation2 + $0x60] sm:$0xff]
        %v524 = vld [vmem:[#allocation2 + $0x68] sm:$0xff]
        %v525 = vld [vmem:[#allocation2 + $0x70] sm:$0xff]
        %v526 = vld [vmem:[#allocation2 + $0x78] sm:$0xff]
        %v527 = vld [vmem:[#allocation2 + $0x80] sm:$0xff]
        %v528 = vld [vmem:[#allocation2 + $0x88] sm:$0xff]
        %v529 = vld [vmem:[#allocation2 + $0x90] sm:$0xff]
        %v530 = vld [vmem:[#allocation2 + $0x98] sm:$0xff]
        %v531 = vld [vmem:[%s184] sm:$0xff]
        %v532 = vld [vmem:[%s184 + $0x8] sm:$0xff]
        %v534 = vsel %vm382, %v510, 0
        %536 = vmatpush.msra.mxu0 0.0
        %537 = vmatpush.msra.mxu0 0.0
        %538 = vmatpush.msra.mxu0 0.0
        %539 = vmatpush.msra.mxu0 0.0
        %540 = vmatpush.msra.mxu0 0.0
        %541 = vmatpush.msra.mxu0 0.0
        %542 = vmatpush.msra.mxu0 %v529
        %543 = vmatpush.msra.mxu0 %v527
        %544 = vmatpush.msra.mxu0 %v525
        %545 = vmatpush.msra.mxu0 %v523
        %546 = vmatpush.msra.mxu0 %v521
        %547 = vmatpush.msra.mxu0 %v519
        %548 = vmatpush.msra.mxu0 %v517
        %549 = vmatpush.msra.mxu0 %v515
        %550 = vmatpush.msra.mxu0 %v513
        %551 = vmatpush.msra.mxu0 %v511
        %552 = vmatmul.f32.gmra.mxu0 %v534
        %v553 = vpop.f32.mrf.mxu0
        %v554 = vadd.f32 %v531, %v553
        %555 = vdwg.mxu0
        %556 = vmatpush.msra.mxu0 0.0
        %557 = vmatpush.msra.mxu0 0.0
        %558 = vmatpush.msra.mxu0 0.0
        %559 = vmatpush.msra.mxu0 0.0
        %560 = vmatpush.msra.mxu0 0.0
        %561 = vmatpush.msra.mxu0 0.0
        %562 = vmatpush.msra.mxu0 %v530
        %563 = vmatpush.msra.mxu0 %v528
        %564 = vmatpush.msra.mxu0 %v526
        %565 = vmatpush.msra.mxu0 %v524
        %566 = vmatpush.msra.mxu0 %v522
        %567 = vmatpush.msra.mxu0 %v520
        %568 = vmatpush.msra.mxu0 %v518
        %569 = vmatpush.msra.mxu0 %v516
        %570 = vmatpush.msra.mxu0 %v514
        %571 = vmatpush.msra.mxu0 %v512
        %572 = vmatmul.f32.gmra.mxu0 %v534
        %v573 = vpop.f32.mrf.mxu0
        %v574 = vadd.f32 %v532, %v573
        %575 = vdwg.mxu0
        %576 = vst [vmem:[%s217] sm:$0xff] %v554
        %577 = vst [vmem:[%s217 + $0x8] sm:$0xff] %v574
        %s578 = sand.u32 %s97, 1
        %s579 = scalar_lea.sflag [#allocation5], %s578
        %s580 = sand.u32 %s97, 1
        %s581 = smul.addr %s580, 16
        %s582 = scalar_lea.vmem [#allocation9], %s581
        // Predicated region
        $region45: #{tpu_custom_call.1} parent=31 // pred_check
          %p583 = pneg %p107
        $region46: #{tpu_custom_call.1} parent=31 // pred_check_branch
          %585 = sbr.rel (%p583) target = $region48
        $region47: #{tpu_custom_call.1} parent=31 // pred_region
          %587 = vsyncadd %s579, 0
          %s588 = smul.addr %s21, 2
          %s589 = smul.addr %s588, 8
          %s590 = scalar_lea.hbm %s3, %s589
          %s592 = sshll.u32 %s582, 4
          %s593 = int_to_ptr.vmem [resolvable:$true] %s592
          %s594 = sshll.u32 %s590, 4
          %s595 = int_to_ptr.hbm [resolvable:$true] %s594
          %597 = dma.vmem_to_hbm [thread:$0]  %s593, 256, %s595, %s579
        $region48: #{tpu_custom_call.1} parent=31 // pred_fallthru
          _
      $region32: #{tpu_custom_call.1} parent=5 // pred_fallthru
        _
      %p598 = scmp.le.s32.totalorder 2, %s16
      // Predicated region
      $region49: #{tpu_custom_call.1} parent=5 // pred_check
        %p599 = pneg %p598
      $region50: #{tpu_custom_call.1} parent=5 // pred_check_branch
        %601 = sbr.rel (%p599) target = $region52
      $region51: #{tpu_custom_call.1} parent=5 // pred_region
        %s602 = ssub.s32 %s16, 2
        // Predicated region
        $region53: #{tpu_custom_call.1} parent=51 // pred_check
          %p603 = pneg %p113
        $region54: #{tpu_custom_call.1} parent=51 // pred_check_branch
          %605 = sbr.rel (%p603) target = $region56
        $region55: #{tpu_custom_call.1} parent=51 // pred_region
          %s606 = sand.u32 %s98, 1
          %s607 = scalar_lea.sflag [#allocation5], %s606
          %s608 = sand.u32 %s98, 1
          %s609 = smul.addr %s608, 16
          %s610 = scalar_lea.vmem [#allocation9], %s609
          %612 = dma.done %s607, 256
        $region56: #{tpu_custom_call.1} parent=51 // pred_fallthru
          _
      $region52: #{tpu_custom_call.1} parent=5 // pred_fallthru
        _
    $region6: #{tpu_custom_call.1} parent=1 // loop_footer
      %s20 = sadd.s32 1, %s16
    $region7: #{tpu_custom_call.1} parent=1 // loop_footer_branch
      %15 = sbr.rel target = $region3
    $region8: #{tpu_custom_call.1} parent=1 // loop_exit
      _
    %613 = vsyncpa [#allocation4], 1
    %s614 = scalar_lea.sflag [#allocation4], 1
    %615 = vsyncpa %s614, 1
    %616 = vsyncpa [#allocation7], 1
    %617 = vsyncpa [#allocation5], 1
    %s618 = scalar_lea.sflag [#allocation5], 1
    %619 = vsyncpa %s618, 1

</llo_original>
